<compile_context>
chip_gen: v6e
topology: v6e:2x2x1
jax: 0.10.0
libtpu: 0.0.40
codegen_flags: <defaults>
</compile_context>

<pallas_src>
import functools

import jax
import jax.numpy as jnp
from jax.experimental import pallas as pl
from jax.experimental.pallas import tpu as pltpu


def _round_up(x, m):
    return ((x + m - 1) // m) * m


# ----------------------------- Pallas kernel ------------------------------ #
def _cb_contrastive_kernel(fr_ref, ft_ref, lr_ref, lc_ref, cw_ref, out_ref, *,
                           inv_temp, focus):
    tm = fr_ref.shape[0]          # rows in this block (multiple of 8)
    n = ft_ref.shape[1]           # total number of (real) samples
    c = cw_ref.shape[1]           # number of classes
    row0 = pl.program_id(0) * tm  # global index of first row in this block

    # Pairwise similarity for this row block: bf16 MXU matmul, f32 accumulate.
    # RHS was pre-normalized + pre-transposed once in the wrapper (no in-kernel
    # transpose, DMA'd once thanks to the constant index_map).
    s = jnp.dot(fr_ref[...].astype(jnp.bfloat16), ft_ref[...],
                preferred_element_type=jnp.float32) * jnp.float32(inv_temp)

    col = jax.lax.broadcasted_iota(jnp.int32, (tm, n), 1)
    grow = jax.lax.broadcasted_iota(jnp.int32, (tm, n), 0) + row0
    off_diag = col != grow                                 # exclude self-pair

    # Softmax over the N-1 "other" samples per row, via log-softmax identity:
    # only the per-row log(Z) / 1/Z (tm values) hit the EUP; p itself is e * 1/Z.
    neg_big = jnp.float32(-1e30)
    logits = jnp.where(off_diag, s, neg_big)
    m = jnp.max(logits, axis=-1, keepdims=True)            # (tm, 1)
    shifted = logits - m
    e = jnp.where(off_diag, jnp.exp(shifted), 0.0)         # (tm, n)
    z = jnp.sum(e, axis=-1, keepdims=True)                 # (tm, 1)
    inv_z = 1.0 / z                                        # tm divides only
    log_z = jnp.log(z)                                     # tm logs only
    p = e * inv_z                                          # softmax probs, diag == 0
    log_p = shifted - log_z                                # valid on off-diag entries

    # Positive pairs: same label and not self (built in-kernel from labels).
    same = lr_ref[...] == lc_ref[...]                      # (tm,1)==(1,n) -> (tm,n)
    pos = jnp.logical_and(off_diag, same)
    pos_cnt = jnp.sum(pos.astype(jnp.float32), axis=-1, keepdims=True)

    # log(p) * (1 - p)^focus on positive pairs only.
    one_minus = 1.0 - p
    if float(focus).is_integer():
        pw = jnp.ones_like(p)
        for _ in range(int(focus)):                        # lowers to multiplies
            pw = pw * one_minus
    else:
        pw = jnp.power(jnp.maximum(one_minus, 0.0), jnp.float32(focus))
    val = jnp.where(pos, log_p * pw, 0.0)

    row_mean = jnp.sum(val, axis=-1, keepdims=True) / jnp.maximum(pos_cnt, 1.0)

    # Class-balanced per-sample weight: one-hot masked sum against (1, C) table
    # (padded rows carry label -1 -> weight 0, pos_cnt 0 -> contribute nothing).
    c_iota = jax.lax.broadcasted_iota(jnp.int32, (tm, c), 1)
    onehot = lr_ref[...] == c_iota                          # (tm, c)
    w = jnp.sum(jnp.where(onehot, cw_ref[...], 0.0), axis=-1, keepdims=True)

    contrib = jnp.where(pos_cnt > 0, row_mean, 0.0) * w     # (tm, 1)
    partial = jnp.sum(contrib)                              # scalar for this block

    # Each grid step owns its own lane-dense (8,128) output block -> "parallel".
    out_ref[...] = jnp.broadcast_to(partial, out_ref.shape).astype(jnp.float32)


# ------------------------------ JAX wrapper -------------------------------- #
def cb_contrastive_loss(features, labels, class_weights, *, temp, focus,
                        block_rows=256):
    """features: (N, D) float, labels: (N,) int, class_weights: (C,) float."""
    features = jnp.asarray(features, jnp.float32)
    labels = jnp.asarray(labels, jnp.int32)
    class_weights = jnp.asarray(class_weights, jnp.float32)
    n, d = features.shape
    c = class_weights.shape[0]

    # L2 normalize in f32 (torch.nn.functional.normalize, eps=1e-12).
    norm = jnp.sqrt(jnp.sum(features * features, axis=-1, keepdims=True))
    fn = features / jnp.maximum(norm, 1e-12)

    # Row tiling: TM=256 by default (fits v7x's smaller VMEM; fine on v5e/v6e).
    tm = max(8, min(block_rows, _round_up(n, 8)))
    tm = _round_up(tm, 8)
    n_pad = _round_up(n, tm)
    g = n_pad // tm

    # Padded rows: zero features + label -1 -> zero contribution.
    fn_rows = jnp.pad(fn, ((0, n_pad - n), (0, 0)))              # (n_pad, d) f32
    fn_t = fn.T.astype(jnp.bfloat16)                             # (d, n) bf16, resident RHS
    lab_rows = jnp.pad(labels, (0, n_pad - n),
                       constant_values=-1).reshape(n_pad, 1)     # (n_pad, 1) i32
    lab_cols = labels.reshape(1, n)                              # (1, n) i32
    cw = class_weights.reshape(1, c)                             # (1, c) f32

    kernel = functools.partial(_cb_contrastive_kernel,
                               inv_temp=1.0 / float(temp), focus=float(focus))

    partial_blocks = pl.pallas_call(
        kernel,
        out_shape=jax.ShapeDtypeStruct((8 * g, 128), jnp.float32),
        grid_spec=pltpu.PrefetchScalarGridSpec(
            num_scalar_prefetch=0,
            grid=(g,),
            in_specs=[
                pl.BlockSpec((tm, d), lambda i: (i, 0)),   # row block of features
                pl.BlockSpec((d, n), lambda i: (0, 0)),    # full Fn^T (bf16), resident
                pl.BlockSpec((tm, 1), lambda i: (i, 0)),   # row labels
                pl.BlockSpec((1, n), lambda i: (0, 0)),    # column labels
                pl.BlockSpec((1, c), lambda i: (0, 0)),    # class-balanced weights
            ],
            out_specs=pl.BlockSpec((8, 128), lambda i: (i, 0)),
        ),
        compiler_params=pltpu.CompilerParams(
            dimension_semantics=("parallel",)),
    )(fn_rows, fn_t, lab_rows, lab_cols, cw)

    partials = partial_blocks.reshape(g, 8, 128)[:, 0, 0]
    return -jnp.sum(partials) / jnp.float32(n)


# --------------------- reference (direct PyTorch port) --------------------- #
def reference_loss(features, labels, class_weights, *, temp, focus):
    features = jnp.asarray(features, jnp.float32)
    n, _ = features.shape
    norm = jnp.maximum(jnp.linalg.norm(features, axis=-1, keepdims=True), 1e-12)
    f = features / norm
    w = class_weights[labels]
    total = jnp.float32(0.0)
    for i in range(n):
        idx = jnp.array([j for j in range(n) if j != i])
        fs = f[idx]
        ls = labels[idx]
        sim = jnp.sum(f[i] * fs, axis=-1)
        probs = jax.nn.softmax(sim / temp, axis=0)
        mask = ls == labels[i]
        pos = probs[mask]                               # eager boolean indexing
        if pos.shape[0] > 0:
            ppl = jnp.mean(jnp.log(pos) * (1.0 - pos) ** focus)
            total = total + ppl * w[i]
    return -total / n


# --------------------------------- main ------------------------------------ #
if __name__ == "__main__":
    # Deterministic "module init" (dataset='iemocap_4' => 4 classes).
    temp_param = 0.5
    focus_param = 2.0
    sample_weight_param = 0.99
    class_counts = jnp.array([120, 80, 40, 60], dtype=jnp.float32)   # int_classes
    class_weights = (1.0 - sample_weight_param) / (
        1.0 - sample_weight_param ** class_counts)                    # (C,)

    # Example inputs: N=8 samples, feature dim D=32.
    key = jax.random.PRNGKey(0)
    kf, kl = jax.random.split(key)
    features = jax.random.normal(kf, (8, 32), dtype=jnp.float32)
    labels = jax.random.randint(kl, (8,), 0, 4, dtype=jnp.int32)

    loss = cb_contrastive_loss(features, labels, class_weights,
                               temp=temp_param, focus=focus_param)
    loss = jax.block_until_ready(loss)

    ref = reference_loss(features, labels, class_weights,
                         temp=temp_param, focus=focus_param)
    # Tolerance accounts for bf16 MXU inputs on the similarity matmul.
    assert jnp.allclose(loss, ref, rtol=2e-2, atol=1e-4), (loss, ref)

    print("KERNEL_OK")
</pallas_src>

<mosaic_0001>
module attributes {stable_mosaic.version = 11 : i64} {
  func.func @_cb_contrastive_kernel(%arg0: i32, %arg1: memref<8x32xf32, #tpu.memory_space<vmem>>, %arg2: memref<32x8xbf16, #tpu.memory_space<vmem>>, %arg3: memref<8x1xi32, #tpu.memory_space<vmem>>, %arg4: memref<1x8xi32, #tpu.memory_space<vmem>>, %arg5: memref<1x4xf32, #tpu.memory_space<vmem>>, %arg6: memref<8x128xf32, #tpu.memory_space<vmem>>) attributes {dimension_semantics = [#tpu.dimension_semantics<parallel>], iteration_bounds = array<i64: 1>, scalar_prefetch = 0 : i64, scratch_operands = 0 : i64, tpu.core_type = #tpu.core_type<tc>, window_params = [{transform_indices = @transform_0, window_bounds = array<i64: 8, 32>}, {pipeline_mode = #tpu.pipeline_mode<synchronous>, transform_indices = @transform_1, window_bounds = array<i64: 32, 8>}, {transform_indices = @transform_2, window_bounds = array<i64: 8, 1>}, {pipeline_mode = #tpu.pipeline_mode<synchronous>, transform_indices = @transform_3, window_bounds = array<i64: 1, 8>}, {pipeline_mode = #tpu.pipeline_mode<synchronous>, transform_indices = @transform_4, window_bounds = array<i64: 1, 4>}, {transform_indices = @transform_5, window_bounds = array<i64: 8, 128>}]} {
    %c8_i32 = arith.constant 8 : i32
    %0 = arith.muli %arg0, %c8_i32 : i32
    %c0 = arith.constant 0 : index
    %c0_0 = arith.constant 0 : index
    %1 = vector.load %arg1[%c0, %c0_0] : memref<8x32xf32, #tpu.memory_space<vmem>>, vector<8x32xf32>
    %2 = arith.truncf %1 : vector<8x32xf32> to vector<8x32xbf16>
    %c0_1 = arith.constant 0 : index
    %c0_2 = arith.constant 0 : index
    %3 = vector.load %arg2[%c0_1, %c0_2] : memref<32x8xbf16, #tpu.memory_space<vmem>>, vector<32x8xbf16>
    %cst = arith.constant dense<0.000000e+00> : vector<8x8xf32>
    %4 = tpu.matmul %2, %3, %cst {dimension_numbers = #tpu.dot_dimension_numbers<[1], [0], [0], [1], [0, 0, 1, 1], [], []>} : vector<8x32xbf16>, vector<32x8xbf16>, vector<8x8xf32> -> vector<8x8xf32>
    %cst_3 = arith.constant 2.000000e+00 : f32
    %5 = vector.broadcast %cst_3 : f32 to vector<8x8xf32>
    %6 = arith.mulf %4, %5 : vector<8x8xf32>
    %7 = tpu.iota {dimensions = array<i32: 1>} : vector<8x8xi32>
    %8 = tpu.iota {dimensions = array<i32: 0>} : vector<8x8xi32>
    %9 = vector.broadcast %0 : i32 to vector<8x8xi32>
    %10 = arith.addi %8, %9 : vector<8x8xi32>
    %11 = arith.cmpi ne, %7, %10 : vector<8x8xi32>
    %cst_4 = arith.constant -1.000000e+30 : f32
    %12 = vector.broadcast %cst_4 : f32 to vector<8x8xf32>
    %13 = arith.select %11, %6, %12 : vector<8x8xi1>, vector<8x8xf32>
    %cst_5 = arith.constant dense<0xFF800000> : vector<8xf32>
    %14 = vector.multi_reduction <maximumf>, %13, %cst_5 [1] : vector<8x8xf32> to vector<8xf32>
    %15 = vector.shape_cast %14 : vector<8xf32> to vector<8x1xf32>
    %16 = vector.broadcast %15 : vector<8x1xf32> to vector<8x8xf32>
    %17 = arith.subf %13, %16 : vector<8x8xf32>
    %18 = math.exp %17 : vector<8x8xf32>
    %cst_6 = arith.constant 0.000000e+00 : f32
    %19 = vector.broadcast %cst_6 : f32 to vector<8x8xf32>
    %20 = arith.select %11, %18, %19 : vector<8x8xi1>, vector<8x8xf32>
    %cst_7 = arith.constant dense<0.000000e+00> : vector<8xf32>
    %21 = vector.multi_reduction <add>, %20, %cst_7 [1] : vector<8x8xf32> to vector<8xf32>
    %22 = vector.shape_cast %21 : vector<8xf32> to vector<8x1xf32>
    %cst_8 = arith.constant 1.000000e+00 : f32
    %23 = vector.broadcast %cst_8 : f32 to vector<8x1xf32>
    %24 = arith.divf %23, %22 : vector<8x1xf32>
    %25 = math.log %22 : vector<8x1xf32>
    %26 = vector.broadcast %24 : vector<8x1xf32> to vector<8x8xf32>
    %27 = arith.mulf %20, %26 : vector<8x8xf32>
    %28 = vector.broadcast %25 : vector<8x1xf32> to vector<8x8xf32>
    %29 = arith.subf %17, %28 : vector<8x8xf32>
    %c0_9 = arith.constant 0 : index
    %c0_10 = arith.constant 0 : index
    %30 = vector.load %arg3[%c0_9, %c0_10] : memref<8x1xi32, #tpu.memory_space<vmem>>, vector<8x1xi32>
    %c0_11 = arith.constant 0 : index
    %c0_12 = arith.constant 0 : index
    %31 = vector.load %arg4[%c0_11, %c0_12] : memref<1x8xi32, #tpu.memory_space<vmem>>, vector<1x8xi32>
    %32 = vector.broadcast %30 : vector<8x1xi32> to vector<8x8xi32>
    %33 = vector.broadcast %31 : vector<1x8xi32> to vector<8x8xi32>
    %34 = arith.cmpi eq, %32, %33 : vector<8x8xi32>
    %35 = arith.andi %11, %34 : vector<8x8xi1>
    %36 = arith.extui %35 : vector<8x8xi1> to vector<8x8xi32>
    %37 = arith.sitofp %36 : vector<8x8xi32> to vector<8x8xf32>
    %cst_13 = arith.constant dense<0.000000e+00> : vector<8xf32>
    %38 = vector.multi_reduction <add>, %37, %cst_13 [1] : vector<8x8xf32> to vector<8xf32>
    %39 = vector.shape_cast %38 : vector<8xf32> to vector<8x1xf32>
    %cst_14 = arith.constant 1.000000e+00 : f32
    %40 = vector.broadcast %cst_14 : f32 to vector<8x8xf32>
    %41 = arith.subf %40, %27 : vector<8x8xf32>
    %cst_15 = arith.constant 1.000000e+00 : f32
    %42 = vector.broadcast %cst_15 : f32 to vector<8x8xf32>
    %43 = arith.mulf %42, %41 : vector<8x8xf32>
    %44 = arith.mulf %43, %41 : vector<8x8xf32>
    %45 = arith.mulf %29, %44 : vector<8x8xf32>
    %cst_16 = arith.constant 0.000000e+00 : f32
    %46 = vector.broadcast %cst_16 : f32 to vector<8x8xf32>
    %47 = arith.select %35, %45, %46 : vector<8x8xi1>, vector<8x8xf32>
    %cst_17 = arith.constant dense<0.000000e+00> : vector<8xf32>
    %48 = vector.multi_reduction <add>, %47, %cst_17 [1] : vector<8x8xf32> to vector<8xf32>
    %49 = vector.shape_cast %48 : vector<8xf32> to vector<8x1xf32>
    %cst_18 = arith.constant 1.000000e+00 : f32
    %50 = vector.broadcast %cst_18 : f32 to vector<8x1xf32>
    %51 = arith.maximumf %39, %50 : vector<8x1xf32>
    %52 = arith.divf %49, %51 : vector<8x1xf32>
    %53 = tpu.iota {dimensions = array<i32: 1>} : vector<8x4xi32>
    %c0_19 = arith.constant 0 : index
    %c0_20 = arith.constant 0 : index
    %54 = vector.load %arg3[%c0_19, %c0_20] : memref<8x1xi32, #tpu.memory_space<vmem>>, vector<8x1xi32>
    %55 = vector.broadcast %54 : vector<8x1xi32> to vector<8x4xi32>
    %56 = arith.cmpi eq, %55, %53 : vector<8x4xi32>
    %c0_21 = arith.constant 0 : index
    %c0_22 = arith.constant 0 : index
    %57 = vector.load %arg5[%c0_21, %c0_22] : memref<1x4xf32, #tpu.memory_space<vmem>>, vector<1x4xf32>
    %cst_23 = arith.constant 0.000000e+00 : f32
    %58 = vector.shape_cast %57 : vector<1x4xf32> to vector<1x4xf32>
    %59 = vector.broadcast %58 : vector<1x4xf32> to vector<8x4xf32>
    %60 = vector.broadcast %cst_23 : f32 to vector<8x4xf32>
    %61 = arith.select %56, %59, %60 : vector<8x4xi1>, vector<8x4xf32>
    %cst_24 = arith.constant dense<0.000000e+00> : vector<8xf32>
    %62 = vector.multi_reduction <add>, %61, %cst_24 [1] : vector<8x4xf32> to vector<8xf32>
    %63 = vector.shape_cast %62 : vector<8xf32> to vector<8x1xf32>
    %cst_25 = arith.constant 0.000000e+00 : f32
    %64 = vector.broadcast %cst_25 : f32 to vector<8x1xf32>
    %65 = arith.cmpf ogt, %39, %64 : vector<8x1xf32>
    %cst_26 = arith.constant 0.000000e+00 : f32
    %66 = vector.broadcast %cst_26 : f32 to vector<8x1xf32>
    %67 = arith.select %65, %52, %66 : vector<8x1xi1>, vector<8x1xf32>
    %68 = arith.mulf %67, %63 : vector<8x1xf32>
    %69 = vector.shape_cast %68 : vector<8x1xf32> to vector<1x8x1xf32>
    %cst_27 = arith.constant dense<0.000000e+00> : vector<1xf32>
    %70 = vector.multi_reduction <add>, %69, %cst_27 [1, 2] : vector<1x8x1xf32> to vector<1xf32>
    %71 = vector.shape_cast %70 : vector<1xf32> to vector<1x1x1xf32>
    %72 = vector.extract %71[0, 0, 0] : f32 from vector<1x1x1xf32>
    %73 = vector.broadcast %72 : f32 to vector<8x128xf32>
    %c0_28 = arith.constant 0 : index
    %c0_29 = arith.constant 0 : index
    %74 = vector.load %arg6[%c0_28, %c0_29] : memref<8x128xf32, #tpu.memory_space<vmem>>, vector<8x128xf32>
    tpu.vector_store %arg6[%c0_28, %c0_29], %73 {strides = array<i32>} : memref<8x128xf32, #tpu.memory_space<vmem>>, vector<8x128xf32>,
    return
  }
  func.func @transform_0(%arg0: i32) -> (i32, i32) {
    %c0_i32 = arith.constant 0 : i32
    %c0_i32_0 = arith.constant 0 : i32
    return %arg0, %c0_i32 : i32, i32
  }
  func.func @transform_1(%arg0: i32) -> (i32, i32) {
    %c0_i32 = arith.constant 0 : i32
    %c0_i32_0 = arith.constant 0 : i32
    %c0_i32_1 = arith.constant 0 : i32
    return %c0_i32, %c0_i32_0 : i32, i32
  }
  func.func @transform_2(%arg0: i32) -> (i32, i32) {
    %c0_i32 = arith.constant 0 : i32
    %c0_i32_0 = arith.constant 0 : i32
    return %arg0, %c0_i32 : i32, i32
  }
  func.func @transform_3(%arg0: i32) -> (i32, i32) {
    %c0_i32 = arith.constant 0 : i32
    %c0_i32_0 = arith.constant 0 : i32
    %c0_i32_1 = arith.constant 0 : i32
    return %c0_i32, %c0_i32_0 : i32, i32
  }
  func.func @transform_4(%arg0: i32) -> (i32, i32) {
    %c0_i32 = arith.constant 0 : i32
    %c0_i32_0 = arith.constant 0 : i32
    %c0_i32_1 = arith.constant 0 : i32
    return %c0_i32, %c0_i32_0 : i32, i32
  }
  func.func @transform_5(%arg0: i32) -> (i32, i32) {
    %c0_i32 = arith.constant 0 : i32
    %c0_i32_0 = arith.constant 0 : i32
    return %arg0, %c0_i32 : i32, i32
  }
}

</mosaic_0001>

<llo_original>
// kernel: tpu_custom_call.1
$region0: #{tpu_custom_call.1}
  #allocation0 [shape = 'u32[]', space=smem, size = 0x4, offset = 0x4, fixed_abs, tag = 'smem constant byte address 0x4 - core index']
  #allocation1 [shape = 'u32[144,128]{1,0:T(1,128)}', space=vmem, size = 0x12000, scoped, tag = 'internal scratch']
  %s0 = inlined_call_operand.vmem [shape: f32[8,32], index: 0, kind: input, shape index: {}]
  %s1 = inlined_call_operand.vmem [shape: bf16[32,8], index: 1, kind: input, shape index: {}]
  %s2 = inlined_call_operand.vmem [shape: s32[8,1], index: 2, kind: input, shape index: {}]
  %s3 = inlined_call_operand.vmem [shape: s32[1,8], index: 3, kind: input, shape index: {}]
  %s4 = inlined_call_operand.vmem [shape: f32[1,4], index: 4, kind: input, shape index: {}]
  %s5 = inlined_call_operand.hbm [shape: f32[8,128], index: 5, kind: output, shape index: {}]
  %s6 = sld [smem:[#allocation0]]
  $region30: #{tpu_custom_call.1} parent=0
    _
  %s8 = ssub.s32 1, %s6
  %s9 = scalar_select 0, %s8, %s6
  $region1: #{tpu_custom_call.1} parent=0
    #allocation2 [shape = 'u8[4096]{0}', space=vmem, size = 0x1000, scoped, tag = 'output window, operand 0, single buffered']
    #allocation3 [shape = 's32[1]{0}', space=sflag, size = 0x4, scoped, tag = 'scoped memory for tpu_custom_call.1']
    %10 = vsyncpa [#allocation3], 0
    // Predicated region
    $region2: #{tpu_custom_call.1} parent=1 // pred_check
      _
    $region3: #{tpu_custom_call.1} parent=1 // pred_check_branch
      %12 = sbr.rel (0) target = $region5
    $region4: #{tpu_custom_call.1} parent=1 // pred_region
      _
    $region5: #{tpu_custom_call.1} parent=1 // pred_fallthru
      _
    // Predicated region
    $region6: #{tpu_custom_call.1} parent=1 // pred_check
      _
    $region7: #{tpu_custom_call.1} parent=1 // pred_check_branch
      %14 = sbr.rel (0) target = $region9
    $region8: #{tpu_custom_call.1} parent=1 // pred_region
      _
    $region9: #{tpu_custom_call.1} parent=1 // pred_fallthru
      _
    // Predicated region
    $region10: #{tpu_custom_call.1} parent=1 // pred_check
      _
    $region11: #{tpu_custom_call.1} parent=1 // pred_check_branch
      %16 = sbr.rel (0) target = $region13
    $region12: #{tpu_custom_call.1} parent=1 // pred_region
      _
    $region13: #{tpu_custom_call.1} parent=1 // pred_fallthru
      _
    // Predicated region
    $region14: #{tpu_custom_call.1} parent=1 // pred_check
      _
    $region15: #{tpu_custom_call.1} parent=1 // pred_check_branch
      %18 = sbr.rel (0) target = $region17
    $region16: #{tpu_custom_call.1} parent=1 // pred_region
      _
    $region17: #{tpu_custom_call.1} parent=1 // pred_fallthru
      _
    // Predicated region
    $region18: #{tpu_custom_call.1} parent=1 // pred_check
      _
    $region19: #{tpu_custom_call.1} parent=1 // pred_check_branch
      %20 = sbr.rel (0) target = $region21
    $region20: #{tpu_custom_call.1} parent=1 // pred_region
      _
    $region21: #{tpu_custom_call.1} parent=1 // pred_fallthru
      _
    %s22 = smul.u32 0, 8
    %v23 = vld [vmem:[%s0] sm:$0xff]
    %v24 = vpack.c.bf16 %v23, %v23
    %v25 = vld [vmem:[%s1] sm:$0xf]
    %v26 = vld [vmem:[%s1 + $0x4] sm:$0xf]
    %v27 = vld [vmem:[%s1 + $0x8] sm:$0xf]
    %v28 = vld [vmem:[%s1 + $0xc] sm:$0xf]
    %v33 = vunpack.c.l.b16 %v25
    %v34 = vunpack.c.l.b16 %v26
    %v35 = vunpack.c.l.b16 %v27
    %v36 = vunpack.c.l.b16 %v28
    %v37 = vpack.c.b16 %v34, %v33
    %v38 = vpack.c.b16 %v36, %v35
    %vm41 = vcmask 261120
    %v43 = vsel %vm41, %v24, 0
    %45 = vmatprep.subr.bf16.mxu0 0
    %46 = vmatpush1.bf16.msra.mxu0 0
    %47 = vmatprep.subr.bf16.mxu0 0
    %48 = vmatpush1.bf16.msra.mxu0 0
    %49 = vmatprep.subr.bf16.mxu0 0
    %50 = vmatpush1.bf16.msra.mxu0 0
    %51 = vmatprep.subr.bf16.mxu0 0
    %52 = vmatpush1.bf16.msra.mxu0 0
    %53 = vmatprep.subr.bf16.mxu0 0
    %54 = vmatpush1.bf16.msra.mxu0 0
    %55 = vmatprep.subr.bf16.mxu0 0
    %56 = vmatpush1.bf16.msra.mxu0 0
    %57 = vmatprep.subr.bf16.mxu0 0
    %58 = vmatpush1.bf16.msra.mxu0 %v38
    %59 = vmatprep.subr.bf16.mxu0 0
    %60 = vmatpush1.bf16.msra.mxu0 %v37
    %61 = vmatprep.subr.bf16.mxu0 0
    %62 = vmatpush2.bf16.msra.mxu0 0
    %63 = vmatprep.subr.bf16.mxu0 0
    %64 = vmatpush2.bf16.msra.mxu0 0
    %65 = vmatprep.subr.bf16.mxu0 0
    %66 = vmatpush2.bf16.msra.mxu0 0
    %67 = vmatprep.subr.bf16.mxu0 0
    %68 = vmatpush2.bf16.msra.mxu0 0
    %69 = vmatprep.subr.bf16.mxu0 0
    %70 = vmatpush2.bf16.msra.mxu0 0
    %71 = vmatprep.subr.bf16.mxu0 0
    %72 = vmatpush2.bf16.msra.mxu0 0
    %73 = vmatprep.subr.bf16.mxu0 0
    %74 = vmatpush2.bf16.msra.mxu0 0
    %75 = vmatprep.subr.bf16.mxu0 0
    %76 = vmatpush2.bf16.msra.mxu0 0
    %77 = vmatprep.mubr.bf16.mxu0 0
    %78 = vmatmul.mubr.bf16.gmra.mxu0 %v43
    %v79 = vpop.f32.mrf.mxu0
    %v80 = vadd.f32 0.0, %v79
    %v81 = vpop.f32.mrf.mxu0
    %v82 = vpop.f32.mrf.mxu0
    %v83 = vpop.f32.mrf.mxu0
    %84 = vdwg.mxu0
    %v85 = vmul.f32 %v80, 2.0
    %v86 = vlaneseq
    %v87 = vand.u32 %v86, 127
    %v88 = vlaneseq
    %v89 = vshrl.u32 %v88, 7
    %v90 = vstv %s22
    %v91 = vadd.s32 %v89, %v90
    %vm92 = vcmp.ne.s32.totalorder %v87, %v91
    %v93 = vsel %vm92, %v85, -1e+30
    %vm94 = vcmask 64512
    %v95 = vsel %vm94, %v93, -inf
    %96 = vmax.xlane.f32.xlu0 %v95
    %v97 = vpop.xlane.xlu0 %96
    %v98 = vsub.f32 %v93, %v97
    %v99 = vmul.f32 %v98, 1.442695
    %v100 = vpow.pop %v99
    %v101 = vsel %vm92, %v100, 0.0
    %v102 = vsel %vm94, %v101, 0.0
    %103 = vadd.xlane.f32.xlu0 %v102
    %v104 = vpop.xlane.xlu0 %103
    %v105 = vrcp.pop %v104
    %v106 = vmul.f32 1.0, %v105
    %v107 = vlog2.pop %v104
    %v108 = vmul.f32 %v107, 0.6931472
    %v109 = vmul.f32 %v101, %v106
    %v110 = vsub.f32 %v98, %v108
    %v111 = vld [vmem:[%s2] sm:$0xff]
    %v112 = vld [vmem:[%s3] sm:$0x1]
    %113 = vset.pattern.permute.xlu0 0
    %114 = vperm.xlu0 %113, %v111
    %v115 = vpop.permute.xlu0 %114
    %v116 = vlaneseq
    %v117 = vshrl.u32 %v116, 7
    %v118 = vsub.s32 0, %v117
    %v119 = vrot.slane %v112, %v118
    %vm120 = vcmp.eq.s32.totalorder %v115, %v119
    %vm121 = vmand %vm92, %vm120
    %v122 = vsel %vm121, 1, 0
    %v123 = vcvt.s32.f32 %v122
    %v124 = vsel %vm94, %v123, 0.0
    %125 = vadd.xlane.f32.xlu0 %v124
    %v126 = vpop.xlane.xlu0 %125
    %v127 = vsub.f32 1.0, %v109
    %v128 = vmul.f32 %v127, %v127
    %v129 = vmul.f32 %v110, %v128
    %v130 = vsel %vm121, %v129, 0.0
    %v131 = vsel %vm94, %v130, 0.0
    %132 = vadd.xlane.f32.xlu0 %v131
    %v133 = vpop.xlane.xlu0 %132
    %v134 = vmax.f32 %v126, 1.0
    %v135 = vrcp.pop %v134
    %v136 = vmul.f32 %v133, %v135
    %vm137 = vcmp.eq.s32.totalorder %v115, %v87
    %v138 = vld [vmem:[%s4] sm:$0x1]
    %v140 = vlaneseq
    %v141 = vshrl.u32 %v140, 7
    %v142 = vsub.s32 0, %v141
    %v143 = vrot.slane %v138, %v142
    %v145 = vsel %vm137, %v143, 0.0
    %vm146 = vcmask 31744
    %v147 = vsel %vm146, %v145, 0.0
    %148 = vadd.xlane.f32.xlu0 %v147
    %v149 = vpop.xlane.xlu0 %148
    %vm150 = vcmp.gt.f32.partialorder %v126, 0.0
    %v151 = vsel %vm150, %v136, 0.0
    %v152 = vmul.f32 %v151, %v149
    %vm153 = vcmask 7168
    %v154 = vsel %vm153, %v152, 0.0
    %155 = vadd.xlane.f32.xlu0 %v154
    %v156 = vpop.xlane.xlu0 %155
    %v157 = vrot.slane %v156, 4
    %v158 = vadd.f32 %v156, %v157
    %v159 = vrot.slane %v158, 2
    %v160 = vadd.f32 %v158, %v159
    %v161 = vrot.slane %v160, 1
    %v162 = vadd.f32 %v160, %v161
    %s163 = vtos %v162
    %v164 = vstv %s163
    %165 = vst [vmem:[#allocation2] sm:$0xff] %v164
    // Predicated region
    $region22: #{tpu_custom_call.1} parent=1 // pred_check
      _
    $region23: #{tpu_custom_call.1} parent=1 // pred_check_branch
      %167 = sbr.rel (0) target = $region25
    $region24: #{tpu_custom_call.1} parent=1 // pred_region
      %s169 = ssub.s32 128, 128
      %170 = vsyncadd [#allocation3], %s169
      %s172 = sshll.u32 [#allocation2], 4
      %s173 = int_to_ptr.vmem [resolvable:$true] %s172
      %175 = dma.vmem_to_hbm [thread:$0]  %s173, 128, %s5, [#allocation3]
    $region25: #{tpu_custom_call.1} parent=1 // pred_fallthru
      _
    // Predicated region
    $region26: #{tpu_custom_call.1} parent=1 // pred_check
      _
    $region27: #{tpu_custom_call.1} parent=1 // pred_check_branch
      %177 = sbr.rel (0) target = $region29
    $region28: #{tpu_custom_call.1} parent=1 // pred_region
      %178 = dma.done [#allocation3], 128
    $region29: #{tpu_custom_call.1} parent=1 // pred_fallthru
      _
    %179 = vsyncpa [#allocation3], 1

</llo_original>
